<compile_context>
chip_gen: v7x
topology: tpu7x:2x2x1
jax: 0.10.0
libtpu: 0.0.40
codegen_flags: <defaults>
</compile_context>

<pallas_src>
import jax
import jax.numpy as jnp
from jax.experimental import pallas as pl
from jax.experimental.pallas import tpu as pltpu


def _norm_kernel(cand_ref, flat_ref, out_ref):
    # cand_ref : VMEM int32 [TB, k]      candidate node indices (-1 = pad)
    # flat_ref : VMEM      [TB, L=2N]    interleaved x0,y0,x1,y1,...
    # out_ref  : VMEM      [TB, L]
    data = flat_ref[...].astype(jnp.float32)               # (TB, L)
    cand = cand_ref[...]                                    # (TB, k)
    tb, L = data.shape
    k = cand.shape[1]

    lane = jax.lax.broadcasted_iota(jnp.int32, (1, L), 1)   # (1, L)
    node_id = lane >> 1                                      # node index per lane
    is_x = (lane & 1) == 0                                   # even lanes = x

    # Candidate membership + per-row "has any valid candidate" flag.
    # node_id >= 0, so a padding candidate (-1) can never match: no extra AND.
    # TODO(synk): verify via bundle dump that the (TB,1) candidate column
    # compare lowers to a cheap lane splat (XLU has slack here either way).
    ci = cand[:, 0:1]                                        # (TB, 1)
    member = node_id == ci                                   # (TB, L)
    has_valid = ci != jnp.int32(-1)                          # (TB, 1)
    for i in range(1, k):
        ci = cand[:, i:i + 1]
        member = jnp.logical_or(member, node_id == ci)
        has_valid = jnp.logical_or(has_valid, ci != jnp.int32(-1))

    inf = jnp.float32(jnp.inf)
    mask_x = jnp.logical_and(member, is_x)
    mask_y = jnp.logical_and(member, jnp.logical_not(is_x))
    x_min = jnp.min(jnp.where(mask_x, data, inf), axis=1, keepdims=True)
    x_max = jnp.max(jnp.where(mask_x, data, -inf), axis=1, keepdims=True)
    y_min = jnp.min(jnp.where(mask_y, data, inf), axis=1, keepdims=True)
    y_max = jnp.max(jnp.where(mask_y, data, -inf), axis=1, keepdims=True)

    # All (TB,1) scalar-per-row math below; infinities from zero-valid rows are
    # selected away BEFORE they can reach the (TB,L) arithmetic.
    span = jnp.maximum(x_max - x_min, y_max - y_min)
    span = jnp.where(has_valid, span, jnp.float32(1.0))
    r = jnp.float32(1.0) / jnp.maximum(span, jnp.float32(1e-6))   # exact

    cmin = jnp.where(is_x, x_min, y_min)                     # (TB, L)
    cmin = jnp.where(has_valid, cmin, jnp.float32(0.0))
    r_s = jnp.where(has_valid, r, jnp.float32(1.0))

    norm = jnp.clip(r_s * (data - cmin), 0.0, 1.0)
    # Rows without any valid candidate pass the original coords through
    # unchanged (matches the PyTorch early-continue branch).
    out_ref[...] = jnp.where(has_valid, norm, data).astype(out_ref.dtype)


def _scoped_vmem_bytes():
    """Explicit scoped-VMEM budget: ~half of physical VMEM, capped at 96 MiB.

    v7x (64 MiB phys) -> 32 MiB; v6e / v5e (128 MiB phys) -> 64 MiB.
    """
    try:
        cap = pltpu.get_tpu_info().vmem_capacity_bytes
    except Exception:
        cap = 64 << 20
    return int(min(cap // 2, 96 << 20))


def _pick_tb(batch, lane_width, scoped_vmem):
    """Batch tile: big enough to amortize per-step overhead, small enough that
    the ~4 double-buffered (tb, L) copies fit in half the scoped VMEM and the
    batch grid keeps >= 4 steps (so v7x megacore gets work on both cores)."""
    bytes_per_row = lane_width * 4                 # budget at f32 width
    tb = (scoped_vmem // 2) // (4 * bytes_per_row)
    tb = max(8, (tb // 8) * 8)
    tb_steps = max(8, ((-(-batch // 4) + 7) // 8) * 8)   # ~batch/4, 8-rounded
    tb = min(tb, tb_steps)
    if tb >= batch:
        return batch          # one full-extent block along batch (always legal)
    return tb                 # multiple of 8; ragged tail masked by Pallas


def normalization_layer(nodes, candidate_indices, donate_nodes=False):
    """nodes: [B, N, 2] float, candidate_indices: [B, k] int (-1 = invalid)."""
    B, N, _ = nodes.shape
    k = candidate_indices.shape[1]
    L = 2 * N

    cand = candidate_indices.astype(jnp.int32)
    flat = nodes.reshape(B, L)                     # free reshape: x,y interleaved

    scoped = _scoped_vmem_bytes()
    tb = _pick_tb(B, L, scoped)
    grid = (pl.cdiv(B, tb),)

    out_flat = pl.pallas_call(
        _norm_kernel,
        out_shape=jax.ShapeDtypeStruct((B, L), flat.dtype),
        grid_spec=pltpu.PrefetchScalarGridSpec(
            num_scalar_prefetch=0,
            grid=grid,
            in_specs=[
                pl.BlockSpec((tb, k), lambda g: (g, 0)),   # candidates (VMEM)
                pl.BlockSpec((tb, L), lambda g: (g, 0)),   # interleaved coords
            ],
            out_specs=pl.BlockSpec((tb, L), lambda g: (g, 0)),
        ),
        compiler_params=pltpu.CompilerParams(
            dimension_semantics=("parallel",),             # megacore batch split
            vmem_limit_bytes=scoped,
        ),
        # In-place only when the caller donates the buffer; otherwise XLA would
        # insert a defensive copy that costs a full extra HBM pass.
        input_output_aliases=({1: 0} if donate_nodes else {}),
    )(cand, flat)

    return out_flat.reshape(B, N, 2)


def _reference(nodes, candidate_indices):
    """Pure-JAX replica of the PyTorch forward, for verification."""
    B, N, _ = nodes.shape
    outs = []
    for b in range(B):
        cand = candidate_indices[b]
        valid = cand != -1
        n_valid = int(jnp.sum(valid))
        if n_valid == 0:
            outs.append(nodes[b])
            continue
        vc = cand[valid]
        cc = nodes[b][vc]                                  # (n_valid, 2)
        x_min, x_max = jnp.min(cc[:, 0]), jnp.max(cc[:, 0])
        y_min, y_max = jnp.min(cc[:, 1]), jnp.max(cc[:, 1])
        r = 1.0 / jnp.maximum(jnp.maximum(x_max - x_min, y_max - y_min), 1e-6)
        nx = r * (nodes[b][:, 0] - x_min)
        ny = r * (nodes[b][:, 1] - y_min)
        outs.append(jnp.clip(jnp.stack([nx, ny], axis=-1), 0.0, 1.0))
    return jnp.stack(outs, axis=0)


if __name__ == "__main__":
    key = jax.random.PRNGKey(0)
    B, N, K = 2, 16, 4
    nodes = jax.random.uniform(key, (B, N, 2), dtype=jnp.float32) * 10.0
    # batch 0: three valid candidates + one padding slot; batch 1: all invalid
    candidate_indices = jnp.array([[0, 3, 7, -1],
                                   [-1, -1, -1, -1]], dtype=jnp.int32)

    out = jax.jit(normalization_layer)(nodes, candidate_indices)
    out = jax.block_until_ready(out)

    ref = _reference(nodes, candidate_indices)
    assert out.shape == (B, N, 2)
    assert jnp.allclose(out, ref, atol=1e-5, rtol=1e-5), (out, ref)
    print("KERNEL_OK")
</pallas_src>

<mosaic_0001>
module attributes {stable_mosaic.version = 11 : i64} {
  func.func @_norm_kernel(%arg0: i32, %arg1: memref<2x4xi32, #tpu.memory_space<vmem>>, %arg2: memref<2x32xf32, #tpu.memory_space<vmem>>, %arg3: memref<2x32xf32, #tpu.memory_space<vmem>>) attributes {dimension_semantics = [#tpu.dimension_semantics<parallel>], iteration_bounds = array<i64: 1>, scalar_prefetch = 0 : i64, scratch_operands = 0 : i64, tpu.core_type = #tpu.core_type<tc>, window_params = [{transform_indices = @transform_0, window_bounds = array<i64: 2, 4>}, {transform_indices = @transform_1, window_bounds = array<i64: 2, 32>}, {transform_indices = @transform_2, window_bounds = array<i64: 2, 32>}]} {
    %c0 = arith.constant 0 : index
    %c0_0 = arith.constant 0 : index
    %0 = vector.load %arg2[%c0, %c0_0] : memref<2x32xf32, #tpu.memory_space<vmem>>, vector<2x32xf32>
    %c0_1 = arith.constant 0 : index
    %c0_2 = arith.constant 0 : index
    %1 = vector.load %arg1[%c0_1, %c0_2] : memref<2x4xi32, #tpu.memory_space<vmem>>, vector<2x4xi32>
    %2 = tpu.iota {dimensions = array<i32: 1>} : vector<1x32xi32>
    %c1_i32 = arith.constant 1 : i32
    %3 = vector.broadcast %c1_i32 : i32 to vector<1x32xi32>
    %4 = arith.shrsi %2, %3 : vector<1x32xi32>
    %c1_i32_3 = arith.constant 1 : i32
    %5 = vector.broadcast %c1_i32_3 : i32 to vector<1x32xi32>
    %6 = arith.andi %2, %5 : vector<1x32xi32>
    %c0_i32 = arith.constant 0 : i32
    %7 = vector.broadcast %c0_i32 : i32 to vector<1x32xi32>
    %8 = arith.cmpi eq, %6, %7 : vector<1x32xi32>
    %9 = vector.extract_strided_slice %1 {offsets = [0, 0], sizes = [2, 1], strides = [1, 1]} : vector<2x4xi32> to vector<2x1xi32>
    %10 = vector.broadcast %4 : vector<1x32xi32> to vector<2x32xi32>
    %11 = vector.broadcast %9 : vector<2x1xi32> to vector<2x32xi32>
    %12 = arith.cmpi eq, %10, %11 : vector<2x32xi32>
    %c-1_i32 = arith.constant -1 : i32
    %13 = vector.broadcast %c-1_i32 : i32 to vector<2x1xi32>
    %14 = arith.cmpi ne, %9, %13 : vector<2x1xi32>
    %15 = vector.extract_strided_slice %1 {offsets = [0, 1], sizes = [2, 1], strides = [1, 1]} : vector<2x4xi32> to vector<2x1xi32>
    %16 = vector.broadcast %4 : vector<1x32xi32> to vector<2x32xi32>
    %17 = vector.broadcast %15 : vector<2x1xi32> to vector<2x32xi32>
    %18 = arith.cmpi eq, %16, %17 : vector<2x32xi32>
    %19 = arith.ori %12, %18 : vector<2x32xi1>
    %c-1_i32_4 = arith.constant -1 : i32
    %20 = vector.broadcast %c-1_i32_4 : i32 to vector<2x1xi32>
    %21 = arith.cmpi ne, %15, %20 : vector<2x1xi32>
    %22 = arith.ori %14, %21 : vector<2x1xi1>
    %23 = vector.extract_strided_slice %1 {offsets = [0, 2], sizes = [2, 1], strides = [1, 1]} : vector<2x4xi32> to vector<2x1xi32>
    %24 = vector.broadcast %4 : vector<1x32xi32> to vector<2x32xi32>
    %25 = vector.broadcast %23 : vector<2x1xi32> to vector<2x32xi32>
    %26 = arith.cmpi eq, %24, %25 : vector<2x32xi32>
    %27 = arith.ori %19, %26 : vector<2x32xi1>
    %c-1_i32_5 = arith.constant -1 : i32
    %28 = vector.broadcast %c-1_i32_5 : i32 to vector<2x1xi32>
    %29 = arith.cmpi ne, %23, %28 : vector<2x1xi32>
    %30 = arith.ori %22, %29 : vector<2x1xi1>
    %31 = vector.extract_strided_slice %1 {offsets = [0, 3], sizes = [2, 1], strides = [1, 1]} : vector<2x4xi32> to vector<2x1xi32>
    %32 = vector.broadcast %4 : vector<1x32xi32> to vector<2x32xi32>
    %33 = vector.broadcast %31 : vector<2x1xi32> to vector<2x32xi32>
    %34 = arith.cmpi eq, %32, %33 : vector<2x32xi32>
    %35 = arith.ori %27, %34 : vector<2x32xi1>
    %c-1_i32_6 = arith.constant -1 : i32
    %36 = vector.broadcast %c-1_i32_6 : i32 to vector<2x1xi32>
    %37 = arith.cmpi ne, %31, %36 : vector<2x1xi32>
    %38 = arith.ori %30, %37 : vector<2x1xi1>
    %39 = vector.broadcast %8 : vector<1x32xi1> to vector<2x32xi1>
    %40 = arith.andi %35, %39 : vector<2x32xi1>
    %cst = arith.constant dense<true> : vector<1x32xi1>
    %41 = arith.xori %8, %cst : vector<1x32xi1>
    %42 = vector.broadcast %41 : vector<1x32xi1> to vector<2x32xi1>
    %43 = arith.andi %35, %42 : vector<2x32xi1>
    %cst_7 = arith.constant 0x7F800000 : f32
    %44 = vector.broadcast %cst_7 : f32 to vector<2x32xf32>
    %45 = arith.select %40, %0, %44 : vector<2x32xi1>, vector<2x32xf32>
    %cst_8 = arith.constant dense<0x7F800000> : vector<2xf32>
    %46 = vector.multi_reduction <minimumf>, %45, %cst_8 [1] : vector<2x32xf32> to vector<2xf32>
    %47 = vector.shape_cast %46 : vector<2xf32> to vector<2x1xf32>
    %cst_9 = arith.constant 0.000000e+00 : f32
    %cst_10 = arith.constant 0x7F800000 : f32
    %48 = arith.subf %cst_9, %cst_10 : f32
    %49 = vector.broadcast %48 : f32 to vector<2x32xf32>
    %50 = arith.select %40, %0, %49 : vector<2x32xi1>, vector<2x32xf32>
    %cst_11 = arith.constant dense<0xFF800000> : vector<2xf32>
    %51 = vector.multi_reduction <maximumf>, %50, %cst_11 [1] : vector<2x32xf32> to vector<2xf32>
    %52 = vector.shape_cast %51 : vector<2xf32> to vector<2x1xf32>
    %cst_12 = arith.constant 0x7F800000 : f32
    %53 = vector.broadcast %cst_12 : f32 to vector<2x32xf32>
    %54 = arith.select %43, %0, %53 : vector<2x32xi1>, vector<2x32xf32>
    %cst_13 = arith.constant dense<0x7F800000> : vector<2xf32>
    %55 = vector.multi_reduction <minimumf>, %54, %cst_13 [1] : vector<2x32xf32> to vector<2xf32>
    %56 = vector.shape_cast %55 : vector<2xf32> to vector<2x1xf32>
    %cst_14 = arith.constant 0.000000e+00 : f32
    %cst_15 = arith.constant 0x7F800000 : f32
    %57 = arith.subf %cst_14, %cst_15 : f32
    %58 = vector.broadcast %57 : f32 to vector<2x32xf32>
    %59 = arith.select %43, %0, %58 : vector<2x32xi1>, vector<2x32xf32>
    %cst_16 = arith.constant dense<0xFF800000> : vector<2xf32>
    %60 = vector.multi_reduction <maximumf>, %59, %cst_16 [1] : vector<2x32xf32> to vector<2xf32>
    %61 = vector.shape_cast %60 : vector<2xf32> to vector<2x1xf32>
    %62 = arith.subf %52, %47 : vector<2x1xf32>
    %63 = arith.subf %61, %56 : vector<2x1xf32>
    %64 = arith.maximumf %62, %63 : vector<2x1xf32>
    %cst_17 = arith.constant 1.000000e+00 : f32
    %65 = vector.broadcast %cst_17 : f32 to vector<2x1xf32>
    %66 = arith.select %38, %64, %65 : vector<2x1xi1>, vector<2x1xf32>
    %cst_18 = arith.constant 9.99999997E-7 : f32
    %67 = vector.broadcast %cst_18 : f32 to vector<2x1xf32>
    %68 = arith.maximumf %66, %67 : vector<2x1xf32>
    %cst_19 = arith.constant 1.000000e+00 : f32
    %69 = vector.broadcast %cst_19 : f32 to vector<2x1xf32>
    %70 = arith.divf %69, %68 : vector<2x1xf32>
    %71 = vector.shape_cast %8 : vector<1x32xi1> to vector<1x32xi1>
    %72 = vector.broadcast %71 : vector<1x32xi1> to vector<2x32xi1>
    %73 = vector.shape_cast %47 : vector<2x1xf32> to vector<2x1xf32>
    %74 = vector.broadcast %73 : vector<2x1xf32> to vector<2x32xf32>
    %75 = vector.shape_cast %56 : vector<2x1xf32> to vector<2x1xf32>
    %76 = vector.broadcast %75 : vector<2x1xf32> to vector<2x32xf32>
    %77 = arith.select %72, %74, %76 : vector<2x32xi1>, vector<2x32xf32>
    %cst_20 = arith.constant 0.000000e+00 : f32
    %78 = vector.shape_cast %38 : vector<2x1xi1> to vector<2x1xi1>
    %79 = vector.broadcast %78 : vector<2x1xi1> to vector<2x32xi1>
    %80 = vector.broadcast %cst_20 : f32 to vector<2x32xf32>
    %81 = arith.select %79, %77, %80 : vector<2x32xi1>, vector<2x32xf32>
    %cst_21 = arith.constant 1.000000e+00 : f32
    %82 = vector.broadcast %cst_21 : f32 to vector<2x1xf32>
    %83 = arith.select %38, %70, %82 : vector<2x1xi1>, vector<2x1xf32>
    %84 = arith.subf %0, %81 : vector<2x32xf32>
    %85 = vector.broadcast %83 : vector<2x1xf32> to vector<2x32xf32>
    %86 = arith.mulf %85, %84 : vector<2x32xf32>
    %cst_22 = arith.constant 0.000000e+00 : f32
    %cst_23 = arith.constant 1.000000e+00 : f32
    %87 = vector.broadcast %cst_22 : f32 to vector<2x32xf32>
    %88 = arith.maximumf %87, %86 : vector<2x32xf32>
    %89 = vector.broadcast %cst_23 : f32 to vector<2x32xf32>
    %90 = arith.minimumf %89, %88 : vector<2x32xf32>
    %91 = vector.shape_cast %38 : vector<2x1xi1> to vector<2x1xi1>
    %92 = vector.broadcast %91 : vector<2x1xi1> to vector<2x32xi1>
    %93 = arith.select %92, %90, %0 : vector<2x32xi1>, vector<2x32xf32>
    %c0_24 = arith.constant 0 : index
    %c0_25 = arith.constant 0 : index
    %94 = vector.load %arg3[%c0_24, %c0_25] : memref<2x32xf32, #tpu.memory_space<vmem>>, vector<2x32xf32>
    tpu.vector_store %arg3[%c0_24, %c0_25], %93 {strides = array<i32>} : memref<2x32xf32, #tpu.memory_space<vmem>>, vector<2x32xf32>,
    return
  }
  func.func @transform_0(%arg0: i32) -> (i32, i32) {
    %c0_i32 = arith.constant 0 : i32
    %c0_i32_0 = arith.constant 0 : i32
    return %arg0, %c0_i32 : i32, i32
  }
  func.func @transform_1(%arg0: i32) -> (i32, i32) {
    %c0_i32 = arith.constant 0 : i32
    %c0_i32_0 = arith.constant 0 : i32
    return %arg0, %c0_i32 : i32, i32
  }
  func.func @transform_2(%arg0: i32) -> (i32, i32) {
    %c0_i32 = arith.constant 0 : i32
    %c0_i32_0 = arith.constant 0 : i32
    return %arg0, %c0_i32 : i32, i32
  }
}

</mosaic_0001>

<llo_original>
// kernel: normalization_layer.1
$region0: #{normalization_layer.1}
  #allocation0 [shape = 'u32[]', space=smem, size = 0x4, offset = 0x4, fixed_abs, tag = 'smem constant byte address 0x4 - core index']
  #allocation1 [shape = 'u32[144,128]{1,0:T(1,128)}', space=vmem, size = 0x12000, scoped, tag = 'internal scratch']
  %s0 = inlined_call_operand.vmem [shape: s32[2,4], index: 0, kind: input, shape index: {}]
  %s1 = inlined_call_operand.vmem [shape: f32[2,32], index: 1, kind: input, shape index: {}]
  %s2 = inlined_call_operand.vmem [shape: f32[2,32], index: 2, kind: output, shape index: {}]
  %s3 = sld [smem:[#allocation0]]
  $region18: #{normalization_layer.1} parent=0
    _
  %s5 = ssub.s32 1, %s3
  %s6 = scalar_select 0, %s5, %s3
  // Predicated region
  $region2: #{normalization_layer.1} parent=0 // pred_check
    _
  $region3: #{normalization_layer.1} parent=0 // pred_check_branch
    %8 = sbr.rel (0) target = $region5
  $region4: #{normalization_layer.1} parent=0 // pred_region
    _
  $region5: #{normalization_layer.1} parent=0 // pred_fallthru
    _
  // Predicated region
  $region6: #{normalization_layer.1} parent=0 // pred_check
    _
  $region7: #{normalization_layer.1} parent=0 // pred_check_branch
    %10 = sbr.rel (0) target = $region9
  $region8: #{normalization_layer.1} parent=0 // pred_region
    _
  $region9: #{normalization_layer.1} parent=0 // pred_fallthru
    _
  %v11 = vld [vmem:[%s1] sm:$0x3]
  %v12 = vld [vmem:[%s0] sm:$0x3]
  %v13 = vlaneseq
  %v14 = vand.u32 %v13, 127
  %v15 = vshra.s32 %v14, 1
  %v16 = vand.u32 %v14, 1
  %vm17 = vcmp.eq.s32.totalorder %v16, 0
  %18 = vset.pattern.permute.xlu0 0
  %19 = vperm.xlu0 %18, %v12
  %v20 = vpop.permute.xlu0 %19
  %vm21 = vcmp.eq.s32.totalorder %v15, %v20
  %vm22 = vcmp.ne.s32.totalorder %v12, 4294967295
  %23 = vset.pattern.permute.xlu0 1
  %24 = vperm.xlu0 %23, %v12
  %v25 = vpop.permute.xlu0 %24
  %vm26 = vcmp.eq.s32.totalorder %v15, %v25
  %vm27 = vmor %vm21, %vm26
  %v28 = vsel %vm22, 1, 0
  %29 = vrot.lane.b32.xlu0 %v28, 127
  %v30 = vpop.permute.xlu0 %29
  %vm31 = vcmp.ne.s32.totalorder %v30, 0
  %vm32 = vmor %vm22, %vm31
  %33 = vset.pattern.permute.xlu0 2
  %34 = vperm.xlu0 %33, %v12
  %v35 = vpop.permute.xlu0 %34
  %vm36 = vcmp.eq.s32.totalorder %v15, %v35
  %vm37 = vmor %vm27, %vm36
  %38 = vrot.lane.b32.xlu0 %v28, 126
  %v39 = vpop.permute.xlu0 %38
  %vm40 = vcmp.ne.s32.totalorder %v39, 0
  %vm41 = vmor %vm32, %vm40
  %42 = vset.pattern.permute.xlu0 3
  %43 = vperm.xlu0 %42, %v12
  %v44 = vpop.permute.xlu0 %43
  %vm45 = vcmp.eq.s32.totalorder %v15, %v44
  %vm46 = vmor %vm37, %vm45
  %47 = vrot.lane.b32.xlu0 %v28, 125
  %v48 = vpop.permute.xlu0 %47
  %vm49 = vcmp.ne.s32.totalorder %v48, 0
  %vm50 = vmor %vm41, %vm49
  %v51 = vsel %vm17, 1, 0
  %vm52 = vcmp.eq.s32.totalorder %v51, 1
  %vm53 = vmand %vm46, %vm52
  %vm54 = vmxor %vm17, 1
  %v55 = vsel %vm54, 1, 0
  %vm56 = vcmp.eq.s32.totalorder %v55, 1
  %vm57 = vmand %vm46, %vm56
  %v58 = vsel %vm53, %v11, inf
  %vm59 = vcmask 254976
  %v60 = vsel %vm59, %v58, inf
  %61 = vmin.xlane.f32.xlu0 %v60
  %v62 = vpop.xlane.xlu0 %61
  %v63 = vsel %vm53, %v11, -inf
  %v64 = vsel %vm59, %v63, -inf
  %65 = vmax.xlane.f32.xlu0 %v64
  %v66 = vpop.xlane.xlu0 %65
  %v67 = vsel %vm57, %v11, inf
  %v68 = vsel %vm59, %v67, inf
  %69 = vmin.xlane.f32.xlu0 %v68
  %v70 = vpop.xlane.xlu0 %69
  %v71 = vsel %vm57, %v11, -inf
  %v72 = vsel %vm59, %v71, -inf
  %73 = vmax.xlane.f32.xlu0 %v72
  %v74 = vpop.xlane.xlu0 %73
  %v75 = vsub.f32 %v66, %v62
  %v76 = vsub.f32 %v74, %v70
  %v77 = vmax.f32 %v75, %v76
  %v78 = vsel %vm50, %v77, 1.0
  %v79 = vmax.f32 %v78, 1e-06
  %v80 = vrcp.pop %v79
  %v81 = vmul.f32 1.0, %v80
  %v82 = vsel %vm52, %v62, %v70
  %v83 = vsel %vm50, 1, 0
  %84 = vset.pattern.permute.xlu0 0
  %85 = vperm.xlu0 %84, %v83
  %v86 = vpop.permute.xlu0 %85
  %vm87 = vcmp.eq.s32.totalorder %v86, 1
  %v88 = vsel %vm87, %v82, 0.0
  %v89 = vsel %vm50, %v81, 1.0
  %v90 = vsub.f32 %v11, %v88
  %92 = vset.pattern.permute.xlu0 0
  %93 = vperm.xlu0 %92, %v89
  %v94 = vpop.permute.xlu0 %93
  %v96 = vmul.f32 %v94, %v90
  %v97 = vmax.f32 %v96, 0.0
  %v98 = vmin.f32 %v97, 1.0
  %v99 = vsel %vm87, %v98, %v11
  %100 = vst.msk [vmem:[%s2] sm:$0x3] %vm59, %v99
  // Predicated region
  $region10: #{normalization_layer.1} parent=0 // pred_check
    _
  $region11: #{normalization_layer.1} parent=0 // pred_check_branch
    %102 = sbr.rel (0) target = $region13
  $region12: #{normalization_layer.1} parent=0 // pred_region
    _
  $region13: #{normalization_layer.1} parent=0 // pred_fallthru
    _
  // Predicated region
  $region14: #{normalization_layer.1} parent=0 // pred_check
    _
  $region15: #{normalization_layer.1} parent=0 // pred_check_branch
    %104 = sbr.rel (0) target = $region17
  $region16: #{normalization_layer.1} parent=0 // pred_region
    _
  $region17: #{normalization_layer.1} parent=0 // pred_fallthru
    _

</llo_original>
